<compile_context>
chip_gen: v5e
topology: v5e:2x2
jax: 0.10.0
libtpu: 0.0.40
codegen_flags: <defaults>
</compile_context>

<pallas_src>
import jax
import jax.numpy as jnp
from jax import lax
from jax.experimental import pallas as pl
from jax.experimental.pallas import tpu as pltpu

LN_EPS = 1e-5  # torch.nn.LayerNorm default


# -----------------------------------------------------------------------------
# Kernel
# -----------------------------------------------------------------------------
def mlp_predictor_kernel(x_ref, w1_ref, ln_ref, w2_ref, b2_ref, o_ref):
    # x:  [TM, in]      f32 (cast to bf16 in-kernel; VPU cast hides under MXU)
    # w1: [in, hidden]  bf16   ln: [3, hidden] f32 (rows: b1, gamma, beta)
    # w2: [hidden, n_pad] bf16 b2: [1, n_pad] f32  o: [TM, n_pad] f32
    x = x_ref[...].astype(jnp.bfloat16)

    ln = ln_ref[...]
    b1, gamma, beta = ln[0:1, :], ln[1:2, :], ln[2:3, :]

    # ---- Linear 1 + ReLU (bf16 MXU operands, f32 accumulate) ----
    h = jnp.dot(x, w1_ref[...], preferred_element_type=jnp.float32)
    h = jnp.maximum(h + b1, 0.0)

    # ---- LayerNorm over the feature (lane) axis: one-pass statistics ----
    inv_h = 1.0 / h.shape[-1]                       # static python scalar
    s1 = jnp.sum(h, axis=-1, keepdims=True)         # independent XLU reductions
    s2 = jnp.sum(h * h, axis=-1, keepdims=True)
    mean = s1 * inv_h
    var = jnp.maximum(s2 * inv_h - mean * mean, 0.0)  # guard cancellation
    h_norm = (h - mean) * lax.rsqrt(var + LN_EPS)     # rsqrt -> EUP slot
    h_norm = h_norm * gamma + beta

    # ---- Linear 2 (bf16 operands, f32 accumulate) ----
    out = jnp.dot(h_norm.astype(jnp.bfloat16), w2_ref[...],
                  preferred_element_type=jnp.float32)
    o_ref[...] = (out + b2_ref[...]).astype(o_ref.dtype)


# -----------------------------------------------------------------------------
# One-time parameter preparation (hoisted out of the per-call path)
# -----------------------------------------------------------------------------
def prepare_params(w1, b1, gamma, beta, w2, b2):
    """Pad / cast / pack weights ONCE. Do not call per forward pass.

    w1: [in, hidden] f32, b1/gamma/beta: [1, hidden] f32,
    w2: [hidden, n_tasks] f32, b2: [1, n_tasks] f32.
    """
    hidden, n_tasks = w2.shape

    # Lane-dense output: pad the task axis to a multiple of 128 lanes so output
    # stores are unmasked `vst`. Fast path: skip entirely if already aligned.
    # (For n_tasks in the hundreds on v6e/v7x, a 256 multiple fills the 2x256^2
    #  MXU even better; 128 is kept here as the chip-agnostic choice.)
    n_pad = pl.cdiv(n_tasks, 128) * 128
    if n_pad != n_tasks:
        w2 = jnp.zeros((hidden, n_pad), jnp.float32).at[:, :n_tasks].set(w2)
        b2 = jnp.zeros((1, n_pad), jnp.float32).at[:, :n_tasks].set(b2)

    return {
        "w1": w1.astype(jnp.bfloat16),                       # [in, hidden] bf16
        "ln": jnp.concatenate([b1, gamma, beta], axis=0),    # [3, hidden] f32
        "w2": w2.astype(jnp.bfloat16),                       # [hidden, n_pad] bf16
        "b2": b2,                                            # [1, n_pad] f32
        "n_tasks": n_tasks,
        "n_pad": n_pad,
    }


# -----------------------------------------------------------------------------
# Wrapper
# -----------------------------------------------------------------------------
def mlp_predictor(feats, prepared, *, tm=512):
    """feats: [N, in_feats] f32 -> [N, n_tasks] f32."""
    n, in_feats = feats.shape
    w1b, ln, w2b, b2p = prepared["w1"], prepared["ln"], prepared["w2"], prepared["b2"]
    hidden = w1b.shape[1]
    n_pad, n_tasks = prepared["n_pad"], prepared["n_tasks"]

    # Batch tile: full batch when small, otherwise a sublane-aligned tile.
    if n <= tm:
        tm = n
    else:
        tm = max(8, (tm // 8) * 8)
    grid = (pl.cdiv(n, tm),)

    # Weights / biases: constant block index -> fetched once, resident in VMEM,
    # single-buffered (no pointless double buffer for grid-invariant inputs).
    def resident(shape):
        return pl.BlockSpec(shape, lambda i: (0,) * len(shape),
                            pipeline_mode=pl.Buffered(1))

    # Explicit VMEM budget: single-buffered resident weights + double-buffered
    # streaming x/out tiles + headroom; clamped to 64 MiB (legal on all chips).
    resident_bytes = w1b.size * 2 + w2b.size * 2 + ln.size * 4 + b2p.size * 4
    stream_bytes = 2 * tm * (in_feats + n_pad) * 4
    vmem_limit = min(64 << 20,
                     max(32 << 20, 2 * (resident_bytes + stream_bytes) + (2 << 20)))

    out = pl.pallas_call(
        mlp_predictor_kernel,
        out_shape=jax.ShapeDtypeStruct((n, n_pad), jnp.float32),
        grid=grid,
        in_specs=[
            pl.BlockSpec((tm, in_feats), lambda i: (i, 0)),   # x streams (f32)
            resident((in_feats, hidden)),                     # W1 bf16
            resident((3, hidden)),                            # b1 / gamma / beta
            resident((hidden, n_pad)),                        # W2 bf16 (padded)
            resident((1, n_pad)),                             # b2 (padded)
        ],
        out_specs=pl.BlockSpec((tm, n_pad), lambda i: (i, 0)),
        compiler_params=pltpu.CompilerParams(
            dimension_semantics=("parallel",),                # megacore on v7x
            vmem_limit_bytes=int(vmem_limit),
        ),
    )(feats, w1b, ln, w2b, b2p)

    if n_pad != n_tasks:
        out = out[:, :n_tasks]                                # only when padded
    return out


# -----------------------------------------------------------------------------
# Params / references
# -----------------------------------------------------------------------------
def init_params(key, in_feats, hidden_feats, n_tasks):
    """Deterministic synthetic init mimicking nn.Linear's fan-in uniform."""
    k1, k2, k3, k4 = jax.random.split(key, 4)
    bound1 = 1.0 / jnp.sqrt(in_feats)
    bound2 = 1.0 / jnp.sqrt(hidden_feats)
    # Stored already transposed: [in, out].
    w1 = jax.random.uniform(k1, (in_feats, hidden_feats), jnp.float32,
                            -bound1, bound1)
    b1 = jax.random.uniform(k2, (1, hidden_feats), jnp.float32,
                            -bound1, bound1)
    gamma = jnp.ones((1, hidden_feats), jnp.float32)   # LayerNorm weight
    beta = jnp.zeros((1, hidden_feats), jnp.float32)   # LayerNorm bias
    w2 = jax.random.uniform(k3, (hidden_feats, n_tasks), jnp.float32,
                            -bound2, bound2)
    b2 = jax.random.uniform(k4, (1, n_tasks), jnp.float32,
                            -bound2, bound2)
    return w1, b1, gamma, beta, w2, b2


def reference_bf16(feats, w1, b1, gamma, beta, w2, b2):
    """Reference matching the kernel's bf16-operand / f32-accumulate math."""
    h = jnp.dot(feats.astype(jnp.bfloat16), w1.astype(jnp.bfloat16),
                preferred_element_type=jnp.float32)
    h = jnp.maximum(h + b1, 0.0)
    mean = jnp.mean(h, axis=-1, keepdims=True)
    var = jnp.mean((h - mean) ** 2, axis=-1, keepdims=True)
    hn = (h - mean) / jnp.sqrt(var + LN_EPS) * gamma + beta
    out = jnp.dot(hn.astype(jnp.bfloat16), w2.astype(jnp.bfloat16),
                  preferred_element_type=jnp.float32)
    return out + b2


def reference_f32(feats, w1, b1, gamma, beta, w2, b2):
    """Pure-f32 PyTorch-semantics reference."""
    h = jnp.maximum(feats @ w1 + b1, 0.0)
    mean = jnp.mean(h, axis=-1, keepdims=True)
    var = jnp.mean((h - mean) ** 2, axis=-1, keepdims=True)
    hn = (h - mean) / jnp.sqrt(var + LN_EPS) * gamma + beta
    return hn @ w2 + b2


if __name__ == "__main__":
    batch, in_feats, hidden_feats, n_tasks = 8, 16, 32, 4

    key = jax.random.PRNGKey(0)
    kx, kp = jax.random.split(key)
    feats = jax.random.normal(kx, (batch, in_feats), jnp.float32)
    params = init_params(kp, in_feats, hidden_feats, n_tasks)

    prepared = prepare_params(*params)          # one-time weight prep (cached)
    out = mlp_predictor(feats, prepared)
    out = jax.block_until_ready(out)
    assert out.shape == (batch, n_tasks)

    # Tight check against the bf16-matched reference (same MXU math).
    ref_bf = reference_bf16(feats, *params)
    assert jnp.allclose(out, ref_bf, atol=2e-3, rtol=2e-3), \
        f"bf16-ref max err {jnp.max(jnp.abs(out - ref_bf))}"

    # Loose sanity check against the pure-f32 PyTorch semantics.
    ref_f32 = reference_f32(feats, *params)
    assert jnp.allclose(out, ref_f32, atol=5e-2, rtol=5e-2), \
        f"f32-ref max err {jnp.max(jnp.abs(out - ref_f32))}"

    print("KERNEL_OK")
</pallas_src>

<mosaic_0001>
module attributes {stable_mosaic.version = 11 : i64} {
  func.func @mlp_predictor_kernel(%arg0: i32, %arg1: memref<8x16xf32, #tpu.memory_space<vmem>>, %arg2: memref<16x32xbf16, #tpu.memory_space<vmem>>, %arg3: memref<3x32xf32, #tpu.memory_space<vmem>>, %arg4: memref<32x128xbf16, #tpu.memory_space<vmem>>, %arg5: memref<1x128xf32, #tpu.memory_space<vmem>>, %arg6: memref<8x128xf32, #tpu.memory_space<vmem>>) attributes {dimension_semantics = [#tpu.dimension_semantics<parallel>], iteration_bounds = array<i64: 1>, scalar_prefetch = 0 : i64, scratch_operands = 0 : i64, tpu.core_type = #tpu.core_type<tc>, window_params = [{transform_indices = @transform_0, window_bounds = array<i64: 8, 16>}, {pipeline_mode = #tpu.pipeline_mode<synchronous>, transform_indices = @transform_1, window_bounds = array<i64: 16, 32>}, {pipeline_mode = #tpu.pipeline_mode<synchronous>, transform_indices = @transform_2, window_bounds = array<i64: 3, 32>}, {pipeline_mode = #tpu.pipeline_mode<synchronous>, transform_indices = @transform_3, window_bounds = array<i64: 32, 128>}, {pipeline_mode = #tpu.pipeline_mode<synchronous>, transform_indices = @transform_4, window_bounds = array<i64: 1, 128>}, {transform_indices = @transform_5, window_bounds = array<i64: 8, 128>}]} {
    %c0 = arith.constant 0 : index
    %c0_0 = arith.constant 0 : index
    %0 = vector.load %arg1[%c0, %c0_0] : memref<8x16xf32, #tpu.memory_space<vmem>>, vector<8x16xf32>
    %1 = arith.truncf %0 : vector<8x16xf32> to vector<8x16xbf16>
    %c0_1 = arith.constant 0 : index
    %c0_2 = arith.constant 0 : index
    %2 = vector.load %arg3[%c0_1, %c0_2] : memref<3x32xf32, #tpu.memory_space<vmem>>, vector<3x32xf32>
    %3 = vector.extract_strided_slice %2 {offsets = [0, 0], sizes = [1, 32], strides = [1, 1]} : vector<3x32xf32> to vector<1x32xf32>
    %4 = vector.extract_strided_slice %2 {offsets = [1, 0], sizes = [1, 32], strides = [1, 1]} : vector<3x32xf32> to vector<1x32xf32>
    %5 = vector.extract_strided_slice %2 {offsets = [2, 0], sizes = [1, 32], strides = [1, 1]} : vector<3x32xf32> to vector<1x32xf32>
    %c0_3 = arith.constant 0 : index
    %c0_4 = arith.constant 0 : index
    %6 = vector.load %arg2[%c0_3, %c0_4] : memref<16x32xbf16, #tpu.memory_space<vmem>>, vector<16x32xbf16>
    %cst = arith.constant dense<0.000000e+00> : vector<8x32xf32>
    %7 = tpu.matmul %1, %6, %cst {dimension_numbers = #tpu.dot_dimension_numbers<[1], [0], [0], [1], [0, 0, 1, 1], [], []>} : vector<8x16xbf16>, vector<16x32xbf16>, vector<8x32xf32> -> vector<8x32xf32>
    %8 = vector.broadcast %3 : vector<1x32xf32> to vector<8x32xf32>
    %9 = arith.addf %7, %8 : vector<8x32xf32>
    %cst_5 = arith.constant 0.000000e+00 : f32
    %10 = vector.broadcast %cst_5 : f32 to vector<8x32xf32>
    %11 = arith.maximumf %9, %10 : vector<8x32xf32>
    %cst_6 = arith.constant dense<0.000000e+00> : vector<8xf32>
    %12 = vector.multi_reduction <add>, %11, %cst_6 [1] : vector<8x32xf32> to vector<8xf32>
    %13 = vector.shape_cast %12 : vector<8xf32> to vector<8x1xf32>
    %14 = arith.mulf %11, %11 : vector<8x32xf32>
    %cst_7 = arith.constant dense<0.000000e+00> : vector<8xf32>
    %15 = vector.multi_reduction <add>, %14, %cst_7 [1] : vector<8x32xf32> to vector<8xf32>
    %16 = vector.shape_cast %15 : vector<8xf32> to vector<8x1xf32>
    %cst_8 = arith.constant 3.125000e-02 : f32
    %17 = vector.broadcast %cst_8 : f32 to vector<8x1xf32>
    %18 = arith.mulf %13, %17 : vector<8x1xf32>
    %cst_9 = arith.constant 3.125000e-02 : f32
    %19 = vector.broadcast %cst_9 : f32 to vector<8x1xf32>
    %20 = arith.mulf %16, %19 : vector<8x1xf32>
    %21 = arith.mulf %18, %18 : vector<8x1xf32>
    %22 = arith.subf %20, %21 : vector<8x1xf32>
    %cst_10 = arith.constant 0.000000e+00 : f32
    %23 = vector.broadcast %cst_10 : f32 to vector<8x1xf32>
    %24 = arith.maximumf %22, %23 : vector<8x1xf32>
    %25 = vector.broadcast %18 : vector<8x1xf32> to vector<8x32xf32>
    %26 = arith.subf %11, %25 : vector<8x32xf32>
    %cst_11 = arith.constant 9.99999974E-6 : f32
    %27 = vector.broadcast %cst_11 : f32 to vector<8x1xf32>
    %28 = arith.addf %24, %27 : vector<8x1xf32>
    %29 = math.rsqrt %28 : vector<8x1xf32>
    %30 = vector.broadcast %29 : vector<8x1xf32> to vector<8x32xf32>
    %31 = arith.mulf %26, %30 : vector<8x32xf32>
    %32 = vector.broadcast %4 : vector<1x32xf32> to vector<8x32xf32>
    %33 = arith.mulf %31, %32 : vector<8x32xf32>
    %34 = vector.broadcast %5 : vector<1x32xf32> to vector<8x32xf32>
    %35 = arith.addf %33, %34 : vector<8x32xf32>
    %36 = arith.truncf %35 : vector<8x32xf32> to vector<8x32xbf16>
    %c0_12 = arith.constant 0 : index
    %c0_13 = arith.constant 0 : index
    %37 = vector.load %arg4[%c0_12, %c0_13] : memref<32x128xbf16, #tpu.memory_space<vmem>>, vector<32x128xbf16>
    %cst_14 = arith.constant dense<0.000000e+00> : vector<8x128xf32>
    %38 = tpu.matmul %36, %37, %cst_14 {dimension_numbers = #tpu.dot_dimension_numbers<[1], [0], [0], [1], [0, 0, 1, 1], [], []>} : vector<8x32xbf16>, vector<32x128xbf16>, vector<8x128xf32> -> vector<8x128xf32>
    %c0_15 = arith.constant 0 : index
    %c0_16 = arith.constant 0 : index
    %39 = vector.load %arg5[%c0_15, %c0_16] : memref<1x128xf32, #tpu.memory_space<vmem>>, vector<1x128xf32>
    %40 = vector.broadcast %39 : vector<1x128xf32> to vector<8x128xf32>
    %41 = arith.addf %38, %40 : vector<8x128xf32>
    %c0_17 = arith.constant 0 : index
    %c0_18 = arith.constant 0 : index
    %42 = vector.load %arg6[%c0_17, %c0_18] : memref<8x128xf32, #tpu.memory_space<vmem>>, vector<8x128xf32>
    tpu.vector_store %arg6[%c0_17, %c0_18], %41 {strides = array<i32>} : memref<8x128xf32, #tpu.memory_space<vmem>>, vector<8x128xf32>,
    return
  }
  func.func @transform_0(%arg0: i32) -> (i32, i32) {
    %c0_i32 = arith.constant 0 : i32
    %c0_i32_0 = arith.constant 0 : i32
    return %arg0, %c0_i32 : i32, i32
  }
  func.func @transform_1(%arg0: i32) -> (i32, i32) {
    %c0_i32 = arith.constant 0 : i32
    %c0_i32_0 = arith.constant 0 : i32
    %c0_i32_1 = arith.constant 0 : i32
    return %c0_i32, %c0_i32_0 : i32, i32
  }
  func.func @transform_2(%arg0: i32) -> (i32, i32) {
    %c0_i32 = arith.constant 0 : i32
    %c0_i32_0 = arith.constant 0 : i32
    %c0_i32_1 = arith.constant 0 : i32
    return %c0_i32, %c0_i32_0 : i32, i32
  }
  func.func @transform_3(%arg0: i32) -> (i32, i32) {
    %c0_i32 = arith.constant 0 : i32
    %c0_i32_0 = arith.constant 0 : i32
    %c0_i32_1 = arith.constant 0 : i32
    return %c0_i32, %c0_i32_0 : i32, i32
  }
  func.func @transform_4(%arg0: i32) -> (i32, i32) {
    %c0_i32 = arith.constant 0 : i32
    %c0_i32_0 = arith.constant 0 : i32
    %c0_i32_1 = arith.constant 0 : i32
    return %c0_i32, %c0_i32_0 : i32, i32
  }
  func.func @transform_5(%arg0: i32) -> (i32, i32) {
    %c0_i32 = arith.constant 0 : i32
    %c0_i32_0 = arith.constant 0 : i32
    return %arg0, %c0_i32 : i32, i32
  }
}

</mosaic_0001>

<llo_original>
// kernel: tpu_custom_call.1
$region0: #{tpu_custom_call.1}
  #allocation0 [shape = 'u32[]', space=smem, size = 0x4, offset = 0x4, fixed_abs, tag = 'smem constant byte address 0x4 - core index']
  #allocation1 [shape = 'u32[72,128]{1,0:T(1,128)}', space=vmem, size = 0x9000, scoped, tag = 'internal scratch']
  %s0 = inlined_call_operand.hbm [shape: f32[8,16], index: 0, kind: input, shape index: {}]
  %s1 = inlined_call_operand.hbm [shape: bf16[16,32], index: 1, kind: input, shape index: {}]
  %s2 = inlined_call_operand.hbm [shape: f32[3,32], index: 2, kind: input, shape index: {}]
  %s3 = inlined_call_operand.hbm [shape: bf16[32,128], index: 3, kind: input, shape index: {}]
  %s4 = inlined_call_operand.vmem [shape: f32[1,128], index: 4, kind: input, shape index: {}]
  %s5 = inlined_call_operand.hbm [shape: f32[8,128], index: 5, kind: output, shape index: {}]
  %s6 = sld [smem:[#allocation0]]
  $region46: #{tpu_custom_call.1} parent=0
    _
  %s8 = ssub.s32 1, %s6
  %s9 = scalar_select 0, %s8, %s6
  $region1: #{tpu_custom_call.1} parent=0
    #allocation2 [shape = 'u8[4096]{0}', space=vmem, size = 0x1000, scoped, tag = 'input window, operand 0, single buffered']
    #allocation3 [shape = 's32[1]{0}', space=sflag, size = 0x4, scoped, tag = 'scoped memory for tpu_custom_call.1']
    #allocation4 [shape = 's32[1]{0}', space=sflag, size = 0x4, scoped, tag = 'scoped memory for tpu_custom_call.1']
    #allocation5 [shape = 'u8[4096]{0}', space=vmem, size = 0x1000, scoped, tag = 'input window, operand 1, single buffered']
    #allocation6 [shape = 's32[1]{0}', space=sflag, size = 0x4, scoped, tag = 'scoped memory for tpu_custom_call.1']
    #allocation7 [shape = 'u8[2048]{0}', space=vmem, size = 0x800, scoped, tag = 'input window, operand 2, single buffered']
    #allocation8 [shape = 'u8[8192]{0}', space=vmem, size = 0x2000, scoped, tag = 'input window, operand 3, single buffered']
    #allocation9 [shape = 's32[1]{0}', space=sflag, size = 0x4, scoped, tag = 'scoped memory for tpu_custom_call.1']
    #allocation10 [shape = 'u8[4096]{0}', space=vmem, size = 0x1000, scoped, tag = 'output window, operand 0, single buffered']
    %10 = vsyncpa [#allocation3], 0
    %11 = vsyncpa [#allocation6], 0
    %12 = vsyncpa [#allocation9], 0
    %13 = vsyncpa [#allocation4], 0
    // Predicated region
    $region2: #{tpu_custom_call.1} parent=1 // pred_check
      _
    $region3: #{tpu_custom_call.1} parent=1 // pred_check_branch
      %15 = sbr.rel (0) target = $region5
    $region4: #{tpu_custom_call.1} parent=1 // pred_region
      %17 = vsyncadd [#allocation3], 0
      %s19 = sshll.u32 %s0, 4
      %s20 = int_to_ptr.hbm [resolvable:$true] %s19
      %s21 = sshll.u32 [#allocation2], 4
      %s22 = int_to_ptr.vmem [resolvable:$true] %s21
      %24 = dma.hbm_to_vmem [thread:$0]  %s20, 128, %s22, [#allocation3]
    $region5: #{tpu_custom_call.1} parent=1 // pred_fallthru
      _
    // Predicated region
    $region6: #{tpu_custom_call.1} parent=1 // pred_check
      _
    $region7: #{tpu_custom_call.1} parent=1 // pred_check_branch
      %26 = sbr.rel (0) target = $region9
    $region8: #{tpu_custom_call.1} parent=1 // pred_region
      %28 = vsyncadd [#allocation6], 0
      %s29 = sshll.u32 %s1, 4
      %s30 = int_to_ptr.hbm [resolvable:$true] %s29
      %s31 = sshll.u32 [#allocation5], 4
      %s32 = int_to_ptr.vmem [resolvable:$true] %s31
      %37 = dma.hbm_to_vmem [thread:$0]  %s30, 128, %s32, [#allocation6], 64, 64, 4
    $region9: #{tpu_custom_call.1} parent=1 // pred_fallthru
      _
    // Predicated region
    $region10: #{tpu_custom_call.1} parent=1 // pred_check
      _
    $region11: #{tpu_custom_call.1} parent=1 // pred_check_branch
      %39 = sbr.rel (0) target = $region13
    $region12: #{tpu_custom_call.1} parent=1 // pred_region
      %41 = vsyncadd [#allocation6], 0
      %s43 = sshll.u32 %s2, 4
      %s44 = int_to_ptr.hbm [resolvable:$true] %s43
      %s45 = sshll.u32 [#allocation7], 4
      %s46 = int_to_ptr.vmem [resolvable:$true] %s45
      %48 = dma.hbm_to_vmem [thread:$0]  %s44, 64, %s46, [#allocation6]
    $region13: #{tpu_custom_call.1} parent=1 // pred_fallthru
      _
    // Predicated region
    $region14: #{tpu_custom_call.1} parent=1 // pred_check
      _
    $region15: #{tpu_custom_call.1} parent=1 // pred_check_branch
      %50 = sbr.rel (0) target = $region17
    $region16: #{tpu_custom_call.1} parent=1 // pred_region
      %52 = vsyncadd [#allocation9], 0
      %s53 = sshll.u32 %s3, 4
      %s54 = int_to_ptr.hbm [resolvable:$true] %s53
      %s55 = sshll.u32 [#allocation8], 4
      %s56 = int_to_ptr.vmem [resolvable:$true] %s55
      %61 = dma.hbm_to_vmem [thread:$0]  %s54, 256, %s56, [#allocation9], 64, 64, 4
    $region17: #{tpu_custom_call.1} parent=1 // pred_fallthru
      _
    // Predicated region
    $region18: #{tpu_custom_call.1} parent=1 // pred_check
      _
    $region19: #{tpu_custom_call.1} parent=1 // pred_check_branch
      %63 = sbr.rel (0) target = $region21
    $region20: #{tpu_custom_call.1} parent=1 // pred_region
      _
    $region21: #{tpu_custom_call.1} parent=1 // pred_fallthru
      _
    // Predicated region
    $region22: #{tpu_custom_call.1} parent=1 // pred_check
      _
    $region23: #{tpu_custom_call.1} parent=1 // pred_check_branch
      %65 = sbr.rel (0) target = $region25
    $region24: #{tpu_custom_call.1} parent=1 // pred_region
      %67 = dma.done [#allocation3], 128
    $region25: #{tpu_custom_call.1} parent=1 // pred_fallthru
      _
    // Predicated region
    $region26: #{tpu_custom_call.1} parent=1 // pred_check
      _
    $region27: #{tpu_custom_call.1} parent=1 // pred_check_branch
      %69 = sbr.rel (0) target = $region29
    $region28: #{tpu_custom_call.1} parent=1 // pred_region
      %71 = dma.done [#allocation6], 128
    $region29: #{tpu_custom_call.1} parent=1 // pred_fallthru
      _
    // Predicated region
    $region30: #{tpu_custom_call.1} parent=1 // pred_check
      _
    $region31: #{tpu_custom_call.1} parent=1 // pred_check_branch
      %73 = sbr.rel (0) target = $region33
    $region32: #{tpu_custom_call.1} parent=1 // pred_region
      %75 = dma.done [#allocation6], 64
    $region33: #{tpu_custom_call.1} parent=1 // pred_fallthru
      _
    // Predicated region
    $region34: #{tpu_custom_call.1} parent=1 // pred_check
      _
    $region35: #{tpu_custom_call.1} parent=1 // pred_check_branch
      %77 = sbr.rel (0) target = $region37
    $region36: #{tpu_custom_call.1} parent=1 // pred_region
      %79 = dma.done [#allocation9], 256
    $region37: #{tpu_custom_call.1} parent=1 // pred_fallthru
      _
    %v81 = vld [vmem:[#allocation2] sm:$0xff]
    %v82 = vpack.c.bf16 %v81, %v81
    %v83 = vld [vmem:[#allocation7] sm:$0x7]
    %v84 = vld [vmem:[#allocation5] sm:$0xf]
    %v85 = vld [vmem:[#allocation5 + $0x4] sm:$0xf]
    %v86 = vperm.slane %v83, 0
    %v89 = vunpack.c.l.b16 %v84
    %v90 = vunpack.c.l.b16 %v85
    %v91 = vpack.c.b16 %v90, %v89
    %vm93 = vcmask 130048
    %v95 = vsel %vm93, %v82, 0
    %97 = vmatpush.bf16.msra.mxu0 0
    %98 = vmatpush.bf16.msra.mxu0 0
    %99 = vmatpush.bf16.msra.mxu0 0
    %100 = vmatpush.bf16.msra.mxu0 0
    %101 = vmatpush.bf16.msra.mxu0 0
    %102 = vmatpush.bf16.msra.mxu0 0
    %103 = vmatpush.bf16.msra.mxu0 0
    %104 = vmatpush.bf16.msra.mxu0 %v91
    %105 = vmatmul.bf16.gmra.mxu0 %v95
    %v106 = vpop.f32.mrf.mxu0
    %v107 = vadd.f32 %v86, %v106
    %v108 = vpop.f32.mrf.mxu0
    %109 = vdwg.mxu0
    %v110 = vmax.f32 %v107, 0.0
    %vm111 = vcmask 261120
    %v112 = vsel %vm111, %v110, 0.0
    %113 = vadd.xlane.f32.xlu0 %v112
    %v114 = vpop.xlane.xlu0 %113
    %v115 = vmul.f32 %v110, %v110
    %v116 = vsel %vm111, %v115, 0.0
    %117 = vadd.xlane.f32.xlu0 %v116
    %v118 = vpop.xlane.xlu0 %117
    %v119 = vmul.f32 %v114, 0.03125
    %v120 = vmul.f32 %v118, 0.03125
    %v121 = vmul.f32 %v119, %v119
    %v122 = vsub.f32 %v120, %v121
    %v123 = vmax.f32 %v122, 0.0
    %v124 = vsub.f32 %v110, %v119
    %v125 = vadd.f32 %v123, 1e-05
    %v126 = vrsqrt.pop %v125
    %v127 = vmul.f32 %v126, %v125
    %v128 = vmul.f32 %v127, %v126
    %v129 = vmul.f32 0.5, %v128
    %v130 = vsub.f32 1.5, %v129
    %v131 = vmul.f32 %v126, %v130
    %vm132 = vweird.f32 %v125
    %vm133 = vweird.f32 %v126
    %vm134 = vmor %vm132, %vm133
    %v135 = vsel %vm134, %v126, %v131
    %v136 = vmul.f32 %v124, %v135
    %v137 = vperm.slane %v83, 1
    %v138 = vmul.f32 %v136, %v137
    %v139 = vperm.slane %v83, 2
    %v140 = vadd.f32 %v138, %v139
    %v141 = vpack.c.bf16 %v140, %v140
    %v142 = vld [vmem:[#allocation8] sm:$0xf]
    %v143 = vld [vmem:[#allocation8 + $0x4] sm:$0xf]
    %v144 = vld [vmem:[#allocation8 + $0x8] sm:$0xf]
    %v145 = vld [vmem:[#allocation8 + $0xc] sm:$0xf]
    %v146 = vld [vmem:[%s4] sm:$0x1]
    %v148 = vperm.slane %v146, 0
    %v154 = vunpack.c.l.b16 %v142
    %v155 = vunpack.c.l.b16 %v143
    %v156 = vunpack.c.l.b16 %v144
    %v157 = vunpack.c.l.b16 %v145
    %v158 = vpack.c.b16 %v155, %v154
    %v159 = vpack.c.b16 %v157, %v156
    %v163 = vsel %vm111, %v141, 0
    %165 = vmatpush.bf16.msra.mxu0 0
    %166 = vmatpush.bf16.msra.mxu0 0
    %167 = vmatpush.bf16.msra.mxu0 0
    %168 = vmatpush.bf16.msra.mxu0 0
    %169 = vmatpush.bf16.msra.mxu0 0
    %170 = vmatpush.bf16.msra.mxu0 0
    %171 = vmatpush.bf16.msra.mxu0 %v159
    %172 = vmatpush.bf16.msra.mxu0 %v158
    %173 = vmatmul.bf16.gmra.mxu0 %v163
    %v174 = vpop.f32.mrf.mxu0
    %v175 = vadd.f32 %v148, %v174
    %v176 = vpop.f32.mrf.mxu0
    %177 = vdwg.mxu0
    %178 = vst [vmem:[#allocation10] sm:$0xff] %v175
    // Predicated region
    $region38: #{tpu_custom_call.1} parent=1 // pred_check
      _
    $region39: #{tpu_custom_call.1} parent=1 // pred_check_branch
      %180 = sbr.rel (0) target = $region41
    $region40: #{tpu_custom_call.1} parent=1 // pred_region
      %182 = vsyncadd [#allocation4], 0
      %s184 = sshll.u32 [#allocation10], 4
      %s185 = int_to_ptr.vmem [resolvable:$true] %s184
      %s186 = sshll.u32 %s5, 4
      %s187 = int_to_ptr.hbm [resolvable:$true] %s186
      %189 = dma.vmem_to_hbm [thread:$0]  %s185, 128, %s187, [#allocation4]
    $region41: #{tpu_custom_call.1} parent=1 // pred_fallthru
      _
    // Predicated region
    $region42: #{tpu_custom_call.1} parent=1 // pred_check
      _
    $region43: #{tpu_custom_call.1} parent=1 // pred_check_branch
      %191 = sbr.rel (0) target = $region45
    $region44: #{tpu_custom_call.1} parent=1 // pred_region
      %193 = dma.done [#allocation4], 128
    $region45: #{tpu_custom_call.1} parent=1 // pred_fallthru
      _
    %194 = vsyncpa [#allocation3], 1
    %195 = vsyncpa [#allocation6], 1
    %196 = vsyncpa [#allocation9], 1
    %197 = vsyncpa [#allocation4], 1

</llo_original>
